<compile_context>
chip_gen: v7x
topology: tpu7x:2x2x1
jax: 0.10.0
libtpu: 0.0.40
codegen_flags: <defaults>
</compile_context>

<pallas_src>
import functools

import jax
import jax.numpy as jnp
from jax.experimental import pallas as pl
from jax.experimental.pallas import tpu as pltpu

LANE = 128       # vreg lane width (last dim)
SUBLANE = 8      # vreg sublane width (second-to-last dim, f32)
MB = 1024 * 1024


def _round_up(x, m):
    return ((x + m - 1) // m) * m


def _cdiv(a, b):
    return (a + b - 1) // b


def _pick_tile(dim, candidates):
    for c in candidates:
        if dim % c == 0:
            return c
    return dim


@functools.lru_cache(maxsize=None)
def _tpu_vmem_bytes():
    """Physical per-core VMEM bytes; conservative 64 MiB (v7x) if unknown."""
    try:
        info = pltpu.get_tpu_info()
        v = getattr(info, "vmem_capacity_bytes", None)
        if v:
            return int(v)
    except Exception:
        pass
    return 64 * MB


# ----------------------------------------------------------------------------
# Kernel 1: whole MLP fused into one pallas_call.
#   grid = (batch_tiles, layers); batch axis "parallel" (v7x megacore),
#   layer axis "arbitrary" (carried activation).
#   - x stays in HBM (pl.ANY) and is DMA'd into the activation scratch once
#     per batch tile (layer 0), so it is not pinned in VMEM for the whole run.
#   - Activation scratch is in the compute dtype; layer-(l+1) weights are
#     auto-pipelined by BlockSpec while layer l computes.
# ----------------------------------------------------------------------------
def _fused_mlp_kernel(x_hbm, w_ref, b_ref, o_ref, act_ref, dma_sem, *, tm_b):
    # x_hbm : (Bp, D) HBM ref      w_ref : (D, D) layer-l weight slice (VMEM)
    # b_ref : (1, D) f32 bias      o_ref : (tm_b, D) output block
    # act_ref: (tm_b, D) compute-dtype scratch carried across layers
    b = pl.program_id(0)
    l = pl.program_id(1)
    n_layers = pl.num_programs(1)

    @pl.when(l == 0)
    def _():
        # One-shot DMA of this batch tile of x into the activation scratch.
        cp = pltpu.make_async_copy(
            x_hbm.at[pl.ds(b * tm_b, tm_b), :], act_ref, dma_sem)
        cp.start()
        cp.wait()

    acc = jnp.dot(act_ref[...], w_ref[...], preferred_element_type=jnp.float32)
    acc = acc + b_ref[...]                       # f32 bias, broadcast over rows

    @pl.when(l < n_layers - 1)
    def _():
        act_ref[...] = jnp.maximum(acc, 0.0).astype(act_ref.dtype)   # ReLU

    @pl.when(l == n_layers - 1)
    def _():
        o_ref[...] = acc.astype(o_ref.dtype)     # no ReLU on the last layer


def _fused_mlp_call(xp, w_stack, b_stack, out_dtype, tm_b, vmem_limit):
    L, D, _ = w_stack.shape
    Bp = xp.shape[0]
    nb = Bp // tm_b
    kernel = functools.partial(_fused_mlp_kernel, tm_b=tm_b)
    return pl.pallas_call(
        kernel,
        out_shape=jax.ShapeDtypeStruct((Bp, D), out_dtype),
        grid=(nb, L),
        in_specs=[
            pl.BlockSpec(memory_space=pl.ANY),                    # x: stays in HBM
            pl.BlockSpec((None, D, D), lambda b, l: (l, 0, 0)),   # layer-l weight
            pl.BlockSpec((None, 1, D), lambda b, l: (l, 0, 0)),   # layer-l bias
        ],
        out_specs=pl.BlockSpec((tm_b, D), lambda b, l: (b, 0)),   # per-batch tile
        scratch_shapes=[
            pltpu.VMEM((tm_b, D), w_stack.dtype),   # activation carry (compute dtype)
            pltpu.SemaphoreType.DMA(()),            # x-load completion
        ],
        compiler_params=pltpu.CompilerParams(
            dimension_semantics=("parallel", "arbitrary"),
            vmem_limit_bytes=int(vmem_limit),
        ),
    )(xp, w_stack, b_stack)


# ----------------------------------------------------------------------------
# Kernel 2: tiled Linear (+ optional ReLU) with K-axis reduction, f32 VMEM
# accumulator, bias resident across K, epilogue on the last K step.
# ----------------------------------------------------------------------------
def _tiled_linear_kernel(x_ref, w_ref, b_ref, o_ref, acc_ref, *, apply_relu):
    k = pl.program_id(2)

    @pl.when(k == 0)
    def _():
        acc_ref[...] = jnp.zeros_like(acc_ref)

    acc_ref[...] += jnp.dot(x_ref[...], w_ref[...],
                            preferred_element_type=jnp.float32)

    @pl.when(k == pl.num_programs(2) - 1)
    def _():
        out = acc_ref[...] + b_ref[...]
        if apply_relu:
            out = jnp.maximum(out, 0.0)
        o_ref[...] = out.astype(o_ref.dtype)


def pallas_linear_aligned(x, w, b2d, *, apply_relu, out_dtype):
    """x: (Bp, Kp), w: (Kp, Np), b2d: (1, Np); Bp%8==0, Kp%128==0, Np%128==0."""
    Bp, Kp = x.shape
    Kp2, Np = w.shape
    assert Kp == Kp2 and Bp % SUBLANE == 0 and Kp % LANE == 0 and Np % LANE == 0
    tm = _pick_tile(Bp, (256, 128, 64, 32, 16, 8))
    tk = _pick_tile(Kp, (512, 256, 128))
    tn = _pick_tile(Np, (512, 256, 128))   # tn=512 halves x re-reads on wide layers
    grid = (Bp // tm, Np // tn, Kp // tk)

    in_is = jnp.dtype(x.dtype).itemsize
    out_is = jnp.dtype(out_dtype).itemsize
    footprint = (2 * (tm * tk + tk * tn) * in_is   # double-buffered x / w tiles
                 + 2 * tm * tn * out_is            # double-buffered output tile
                 + tm * tn * 4                     # f32 accumulator
                 + 2 * tn * 4)                     # bias tile
    # Right-size the scoped VMEM limit (cap well below v7x's 64 MiB/TC).
    vmem_limit = int(min(32 * MB, max(footprint + 4 * MB, 16 * MB)))

    kernel = functools.partial(_tiled_linear_kernel, apply_relu=apply_relu)
    return pl.pallas_call(
        kernel,
        out_shape=jax.ShapeDtypeStruct((Bp, Np), out_dtype),
        grid=grid,
        in_specs=[
            pl.BlockSpec((tm, tk), lambda i, j, k: (i, k)),
            pl.BlockSpec((tk, tn), lambda i, j, k: (k, j)),
            pl.BlockSpec((1, tn), lambda i, j, k: (0, j)),   # bias resident in K
        ],
        out_specs=pl.BlockSpec((tm, tn), lambda i, j, k: (i, j)),
        scratch_shapes=[pltpu.VMEM((tm, tn), jnp.float32)],
        compiler_params=pltpu.CompilerParams(
            dimension_semantics=("parallel", "parallel", "arbitrary"),
            vmem_limit_bytes=vmem_limit,
        ),
    )(x, w, b2d)


# ----------------------------------------------------------------------------
# Parameter setup (one-time): init (PyTorch layout) + prepare (transpose/pad)
# ----------------------------------------------------------------------------
def init_mlp_params(key, n_inputs, n_outputs, n_layers, layer_size,
                    dtype=jnp.float32):
    """Synthetic init matching PyTorch nn.Linear layout: W is (out, in)."""
    if n_layers == 0:
        return []
    if n_layers == 1:
        dims = [(n_inputs, n_outputs)]
    else:
        dims = [(n_inputs, layer_size)]
        dims += [(layer_size, layer_size)] * (n_layers - 2)
        dims += [(layer_size, n_outputs)]

    params = []
    for fan_in, fan_out in dims:
        key, kw, kb = jax.random.split(key, 3)
        bound = 1.0 / (fan_in ** 0.5)
        w = jax.random.uniform(kw, (fan_out, fan_in), dtype, -bound, bound)
        b = jax.random.uniform(kb, (fan_out,), dtype, -bound, bound)
        params.append((w, b))
    return params


def prepare_mlp(params, *, compute_dtype=jnp.bfloat16):
    """One-time prep: transpose W to (in, out), zero-pad features to 128
    multiples, and (when the VMEM budget allows) stack layers for the fused
    single-call kernel. Zero padding keeps the math exact: padded lanes stay
    exactly 0 through bias-add and ReLU."""
    if len(params) == 0:
        return {"kind": "identity"}

    cdt = jnp.dtype(compute_dtype)
    layers = []
    for w, b in params:
        n_out, n_in = w.shape
        Kp, Np = _round_up(n_in, LANE), _round_up(n_out, LANE)
        w_t = jnp.pad(w.T.astype(cdt), ((0, Kp - n_in), (0, Np - n_out)))
        b_p = jnp.pad(b.astype(jnp.float32), (0, Np - n_out)).reshape(1, Np)
        layers.append((w_t, b_p))

    dims = [w.shape[0] for w, _ in params] + [w.shape[1] for w, _ in params]
    d_max = max(_round_up(d, LANE) for d in dims)

    # Fused-path eligibility: size against the real per-core VMEM budget
    # (v5e/v6e: 128 MiB physical, v7x: 64 MiB per TC).
    vmem_cap = _tpu_vmem_bytes()
    budget = max(min(vmem_cap - 16 * MB, 96 * MB), 24 * MB)
    tm_ref = 256                                  # largest fused batch tile
    fused_bytes = (2 * d_max * d_max * cdt.itemsize   # double-buffered weight block
                   + 4 * d_max * 4                    # double-buffered f32 bias
                   + tm_ref * d_max * cdt.itemsize    # activation scratch
                   + 2 * tm_ref * d_max * 4)          # double-buffered output block
    fused = None
    if d_max <= 2048 and fused_bytes <= budget:
        num_layers = len(params)
        w_stack = jnp.zeros((num_layers, d_max, d_max), cdt)
        b_stack = jnp.zeros((num_layers, 1, d_max), jnp.float32)
        for i, (w, b) in enumerate(params):
            n_out, n_in = w.shape
            w_stack = w_stack.at[i, :n_in, :n_out].set(w.T.astype(cdt))
            b_stack = b_stack.at[i, 0, :n_out].set(b.astype(jnp.float32))
        vmem_limit = int(min(vmem_cap, max(fused_bytes + 8 * MB, 24 * MB)))
        fused = (w_stack, b_stack, d_max, vmem_limit)

    return {
        "kind": "mlp",
        "n_outputs": params[-1][0].shape[0],
        "compute_dtype": cdt,
        "layers": layers,
        "fused": fused,
        "fused_max_batch": 1024,
    }


# ----------------------------------------------------------------------------
# Forward pass (eval semantics of the PyTorch MLP)
# ----------------------------------------------------------------------------
def mlp_forward(state, x):
    if state["kind"] == "identity":
        return x                       # n_layers == 0 -> empty nn.Sequential
    B, K = x.shape
    out_dtype = x.dtype
    cdt = state["compute_dtype"]
    sub = 16 if cdt.itemsize == 2 else SUBLANE   # bf16 packs 2 rows / sublane
    Bp = _round_up(B, sub)

    fused = state["fused"]
    if fused is not None and Bp <= state["fused_max_batch"]:
        w_stack, b_stack, d_max, vmem_limit = fused
        if Bp <= 256:
            tm_b = Bp
        else:
            nb = _cdiv(Bp, 256)                  # batch slabs (v7x: one per TC)
            tm_b = _round_up(_cdiv(Bp, nb), sub)
            Bp = nb * tm_b
        xp = jnp.pad(x.astype(cdt), ((0, Bp - B), (0, d_max - K)))
        out = _fused_mlp_call(xp, w_stack, b_stack, out_dtype, tm_b, vmem_limit)
        return out[:B, :state["n_outputs"]]

    # Per-layer tiled path (very wide layers / very large batches); activations
    # stay lane-padded between layers, sliced only at the end.
    layers = state["layers"]
    kp0 = layers[0][0].shape[0]
    act = jnp.pad(x.astype(cdt), ((0, Bp - B), (0, kp0 - K)))
    n = len(layers)
    for i, (w, b2d) in enumerate(layers):
        last = i == n - 1
        act = pallas_linear_aligned(act, w, b2d, apply_relu=not last,
                                    out_dtype=out_dtype if last else cdt)
    return act[:B, :state["n_outputs"]]


def mlp_reference(params, x):
    """Pure-JAX reference (PyTorch semantics: y = x @ W.T + b, ReLU between)."""
    if not params:
        return x
    out = x
    n = len(params)
    for i, (w, b) in enumerate(params):
        out = out @ w.T + b
        if i < n - 1:
            out = jnp.maximum(out, 0.0)
    return out


# ----------------------------------------------------------------------------
# Demo / self-test
# ----------------------------------------------------------------------------
if __name__ == "__main__":
    key = jax.random.PRNGKey(0)
    kx, kx2, kp = jax.random.split(key, 3)

    batch, n_inputs, n_outputs, n_layers, layer_size = 8, 32, 16, 3, 64
    x = jax.random.normal(kx, (batch, n_inputs), jnp.float32)
    params = init_mlp_params(kp, n_inputs, n_outputs, n_layers, layer_size)
    ref = mlp_reference(params, x)

    # 1) f32 compute, fused single-kernel path (small batch -> one batch tile).
    state_f32 = prepare_mlp(params, compute_dtype=jnp.float32)
    out_fused = jax.block_until_ready(mlp_forward(state_f32, x))
    assert out_fused.shape == (batch, n_outputs)
    assert jnp.allclose(out_fused, ref, atol=1e-5, rtol=1e-5)

    # 2) f32 compute, per-layer tiled path (force by disabling the fused stack).
    state_tiled = dict(state_f32, fused=None)
    out_tiled = jax.block_until_ready(mlp_forward(state_tiled, x))
    assert jnp.allclose(out_tiled, ref, atol=1e-5, rtol=1e-5)

    # 3) bf16 compute with f32 accumulation (the v6e/v7x MXU fast path).
    state_bf16 = prepare_mlp(params, compute_dtype=jnp.bfloat16)
    out_bf16 = jax.block_until_ready(mlp_forward(state_bf16, x))
    assert jnp.allclose(out_bf16, ref, atol=1e-1, rtol=1e-1)

    # 4) f32, larger batch -> exercises the batch-tiled fused grid (nb > 1).
    x2 = jax.random.normal(kx2, (384, n_inputs), jnp.float32)
    ref2 = mlp_reference(params, x2)
    out2 = jax.block_until_ready(mlp_forward(state_f32, x2))
    assert out2.shape == (384, n_outputs)
    assert jnp.allclose(out2, ref2, atol=1e-4, rtol=1e-4)

    print("KERNEL_OK")
</pallas_src>

<mosaic_0001>
module attributes {stable_mosaic.version = 11 : i64} {
  func.func @_fused_mlp_kernel(%arg0: i32, %arg1: i32, %arg2: memref<8x128xf32, #tpu.memory_space<any>>, %arg3: memref<1x128x128xf32, #tpu.memory_space<vmem>>, %arg4: memref<1x1x128xf32, #tpu.memory_space<vmem>>, %arg5: memref<8x128xf32, #tpu.memory_space<vmem>>, %arg6: memref<8x128xf32, #tpu.memory_space<vmem>>, %arg7: memref<!tpu.dma_semaphore, #tpu.memory_space<semaphore_mem>>) attributes {dimension_semantics = [#tpu.dimension_semantics<parallel>, #tpu.dimension_semantics<arbitrary>], iteration_bounds = array<i64: 1, 3>, scalar_prefetch = 0 : i64, scratch_operands = 2 : i64, tpu.core_type = #tpu.core_type<tc>, window_params = [{}, {transform_indices = @transform_1, window_bounds = array<i64: 1, 128, 128>}, {transform_indices = @transform_2, window_bounds = array<i64: 1, 1, 128>}, {transform_indices = @transform_3, window_bounds = array<i64: 8, 128>}]} {
    %c0_i32 = arith.constant 0 : i32
    %0 = arith.cmpi eq, %arg1, %c0_i32 : i32
    %1 = arith.extui %0 : i1 to i32
    %c0_i32_0 = arith.constant 0 : i32
    %2 = arith.cmpi ne, %1, %c0_i32_0 : i32
    scf.if %2 {
      %c8_i32 = arith.constant 8 : i32
      %17 = arith.muli %arg0, %c8_i32 : i32
      %c0_i32_11 = arith.constant 0 : i32
      %18 = tpu.memref_slice %arg2[%17, %c0_i32_11] : memref<8x128xf32, #tpu.memory_space<any>> -> memref<8x128xf32, #tpu.memory_space<any>>
      tpu.enqueue_dma source(%18 : memref<8x128xf32, #tpu.memory_space<any>>) target(%arg6 : memref<8x128xf32, #tpu.memory_space<vmem>>) target_semaphore(%arg7 : memref<!tpu.dma_semaphore, #tpu.memory_space<semaphore_mem>>)
      %c0_i32_12 = arith.constant 0 : i32
      %19 = tpu.memref_slice %arg2[%17, %c0_i32_12] : memref<8x128xf32, #tpu.memory_space<any>> -> memref<8x128xf32, #tpu.memory_space<any>>
      tpu.wait_dma2 semaphore(%arg7 : memref<!tpu.dma_semaphore, #tpu.memory_space<semaphore_mem>>) src(%19 : memref<8x128xf32, #tpu.memory_space<any>>) dst(%arg6 : memref<8x128xf32, #tpu.memory_space<vmem>>)
    } else {
    }
    %c0 = arith.constant 0 : index
    %c0_1 = arith.constant 0 : index
    %3 = vector.load %arg6[%c0, %c0_1] : memref<8x128xf32, #tpu.memory_space<vmem>>, vector<8x128xf32>
    %c0_2 = arith.constant 0 : index
    %c0_3 = arith.constant 0 : index
    %c0_4 = arith.constant 0 : index
    %4 = vector.load %arg3[%c0_2, %c0_3, %c0_4] : memref<1x128x128xf32, #tpu.memory_space<vmem>>, vector<1x128x128xf32>
    %5 = vector.shape_cast %4 : vector<1x128x128xf32> to vector<128x128xf32>
    %cst = arith.constant dense<0.000000e+00> : vector<8x128xf32>
    %6 = tpu.matmul %3, %5, %cst {dimension_numbers = #tpu.dot_dimension_numbers<[1], [0], [0], [1], [0, 0, 1, 1], [], []>} : vector<8x128xf32>, vector<128x128xf32>, vector<8x128xf32> -> vector<8x128xf32>
    %c0_5 = arith.constant 0 : index
    %c0_6 = arith.constant 0 : index
    %c0_7 = arith.constant 0 : index
    %7 = vector.load %arg4[%c0_5, %c0_6, %c0_7] : memref<1x1x128xf32, #tpu.memory_space<vmem>>, vector<1x1x128xf32>
    %8 = vector.shape_cast %7 : vector<1x1x128xf32> to vector<1x128xf32>
    %9 = vector.broadcast %8 : vector<1x128xf32> to vector<8x128xf32>
    %10 = arith.addf %6, %9 : vector<8x128xf32>
    %c2_i32 = arith.constant 2 : i32
    %11 = arith.cmpi slt, %arg1, %c2_i32 : i32
    %12 = arith.extui %11 : i1 to i32
    %c0_i32_8 = arith.constant 0 : i32
    %13 = arith.cmpi ne, %12, %c0_i32_8 : i32
    scf.if %13 {
      %cst_11 = arith.constant 0.000000e+00 : f32
      %17 = vector.broadcast %cst_11 : f32 to vector<8x128xf32>
      %18 = arith.maximumf %10, %17 : vector<8x128xf32>
      %c0_12 = arith.constant 0 : index
      %c0_13 = arith.constant 0 : index
      %19 = vector.load %arg6[%c0_12, %c0_13] : memref<8x128xf32, #tpu.memory_space<vmem>>, vector<8x128xf32>
      tpu.vector_store %arg6[%c0_12, %c0_13], %18 {strides = array<i32>} : memref<8x128xf32, #tpu.memory_space<vmem>>, vector<8x128xf32>,
    } else {
    }
    %c2_i32_9 = arith.constant 2 : i32
    %14 = arith.cmpi eq, %arg1, %c2_i32_9 : i32
    %15 = arith.extui %14 : i1 to i32
    %c0_i32_10 = arith.constant 0 : i32
    %16 = arith.cmpi ne, %15, %c0_i32_10 : i32
    scf.if %16 {
      %c0_11 = arith.constant 0 : index
      %c0_12 = arith.constant 0 : index
      %17 = vector.load %arg5[%c0_11, %c0_12] : memref<8x128xf32, #tpu.memory_space<vmem>>, vector<8x128xf32>
      tpu.vector_store %arg5[%c0_11, %c0_12], %10 {strides = array<i32>} : memref<8x128xf32, #tpu.memory_space<vmem>>, vector<8x128xf32>,
    } else {
    }
    return
  }
  func.func @transform_1(%arg0: i32, %arg1: i32) -> (i32, i32, i32) {
    %c0_i32 = arith.constant 0 : i32
    %c0_i32_0 = arith.constant 0 : i32
    %c0_i32_1 = arith.constant 0 : i32
    return %arg1, %c0_i32, %c0_i32_0 : i32, i32, i32
  }
  func.func @transform_2(%arg0: i32, %arg1: i32) -> (i32, i32, i32) {
    %c0_i32 = arith.constant 0 : i32
    %c0_i32_0 = arith.constant 0 : i32
    %c0_i32_1 = arith.constant 0 : i32
    return %arg1, %c0_i32, %c0_i32_0 : i32, i32, i32
  }
  func.func @transform_3(%arg0: i32, %arg1: i32) -> (i32, i32) {
    %c0_i32 = arith.constant 0 : i32
    %c0_i32_0 = arith.constant 0 : i32
    return %arg0, %c0_i32 : i32, i32
  }
}

</mosaic_0001>

<llo_original>
// kernel: tpu_custom_call.1
$region0: #{tpu_custom_call.1}
  #allocation0 [shape = 'u32[]', space=smem, size = 0x4, offset = 0x4, fixed_abs, tag = 'smem constant byte address 0x4 - core index']
  #allocation1 [shape = 'u32[144,128]{1,0:T(1,128)}', space=vmem, size = 0x12000, scoped, tag = 'internal scratch']
  #allocation2 [shape = 'f32[8,128]{1,0:T(8,128)}', space=vmem, size = 0x1000, scoped, tag = 'scratch operand']
  #allocation3 [shape = 's32[1]{0}', space=sflag, size = 0x4, scoped, tag = 'scratch operand']
  #allocation8 [shape = 's32[]', space=sflag, size = 0x4, offset = 0, fixed_abs, tag = 'sflag constant byte address 0x0 - dummy sync flag']
  #allocation9 [shape = 's32[]', space=sflag, size = 0x4, offset = 0, fixed_abs, tag = 'sflag constant byte address 0x0 - dummy sync flag']
  #allocation10 [shape = 'u32[]', space=smem, size = 0x4, offset = 0x44, fixed_abs, tag = 'smem constant byte address 0x44 - assertion arg 0']
  #allocation11 [shape = 'u32[]', space=smem, size = 0x4, offset = 0x48, fixed_abs, tag = 'smem constant byte address 0x48 - assertion arg 1']
  %s0 = inlined_call_operand.hbm [shape: f32[8,128], index: 0, kind: input, shape index: {}]
  %s1 = inlined_call_operand.hbm [shape: f32[3,128,128], index: 1, kind: input, shape index: {}]
  %s2 = inlined_call_operand.vmem [shape: f32[3,1,128], index: 2, kind: input, shape index: {}]
  %s3 = inlined_call_operand.hbm [shape: f32[8,128], index: 3, kind: output, shape index: {}]
  %s4 = sld [smem:[#allocation0]]
  $region61: #{tpu_custom_call.1} parent=0
    _
  %s6 = ssub.s32 1, %s4
  %s7 = scalar_select 0, %s6, %s4
  $region1: #{tpu_custom_call.1} parent=0
    #allocation4 [shape = 'u8[131072]{0}', space=vmem, size = 0x20000, scoped, tag = 'input window, operand 1']
    #allocation5 [shape = 's32[2]{0}', space=sflag, size = 0x8, scoped, tag = 'scoped memory for tpu_custom_call.1']
    #allocation6 [shape = 's32[2]{0}', space=sflag, size = 0x8, scoped, tag = 'scoped memory for tpu_custom_call.1']
    #allocation7 [shape = 'u8[4096]{0}', space=vmem, size = 0x1000, scoped, tag = 'output window, operand 0, single buffered']
    %8 = vsyncpa [#allocation5], 0
    %s9 = scalar_lea.sflag [#allocation5], 1
    %10 = vsyncpa %s9, 0
    %11 = vsyncpa [#allocation6], 0
    loop: start=0, step=1, limit=5
    $region2: #{tpu_custom_call.1} parent=1 // loop_pre_header
      _
    $region3: #{tpu_custom_call.1} parent=1 // loop_header
      %s13 = sphi 0, %s17
      %p14 = scmp.ge.s32.totalorder %s13, 5
      %s20 = sphi 0, %s32
      %s21 = sphi 0, %s28
      %s22 = sphi 0, %s20
      %s23 = sphi 0, %s21
      %s24 = sphi 0, %s22
      %s25 = sphi 0, %s23
      %s35 = sphi 0, %s37
      %s38 = sphi 0, %s35
      %s39 = sphi 0, %s38
      %s55 = sphi 0, %s39
      %s61 = sphi 0, %s63
      %s64 = sphi 0, %s61
      %s65 = sphi 0, %s64
      %s81 = sphi 0, %s65
      %s87 = sphi 0, %s89
      %s90 = sphi 0, %s87
      %s91 = sphi 0, %s90
      %s107 = sphi 0, %s91
    $region4: #{tpu_custom_call.1} parent=1 // loop_header_branch
      %16 = sbr.rel (%p14) target = $region8
    $region5: #{tpu_custom_call.1} parent=1 // loop_body
      %s18 = ssub.s32 %s13, 1
      %s19 = ssub.s32 %s13, 2
      %s26 = sadd.s32 1, %s21
      %p27 = scmp.ge.s32.totalorder %s26, 3
      %s28 = scalar_select %p27, 0, %s26
      %s29 = sadd.s32 1, %s20
      %s30 = scalar_select %p27, %s29, %s20
      %p31 = scmp.ge.s32.totalorder %s30, 1
      %s32 = scalar_select %p31, 0, %s30
      %s33 = ssub.s32 %s21, %s28
      %p34 = scmp.eq.s32.totalorder %s33, 0
      %s36 = sadd.s32 %s35, 1
      %s37 = scalar_select %p34, %s35, %s36
      %p40 = pneg %p34
      %p41 = scmp.eq.s32.totalorder %s13, 2
      %p42 = por %p40, %p41
      %p43 = scmp.ne.s32.totalorder %s35, %s38
      %p44 = scmp.eq.s32.totalorder %s13, 0
      %p45 = por %p43, %p44
      %p46 = scmp.ne.s32.totalorder %s35, %s38
      %p47 = scmp.eq.s32.totalorder %s18, 2
      %p48 = por %p46, %p47
      %p49 = scmp.ne.s32.totalorder %s38, %s39
      %p50 = scmp.eq.s32.totalorder %s18, 0
      %p51 = por %p49, %p50
      %p52 = scmp.ne.s32.totalorder %s38, %s39
      %p53 = scmp.eq.s32.totalorder %s19, 2
      %p54 = por %p52, %p53
      %p56 = scmp.ne.s32.totalorder %s39, %s55
      %p57 = scmp.eq.s32.totalorder %s19, 0
      %p58 = por %p56, %p57
      %s59 = ssub.s32 %s21, %s28
      %p60 = scmp.eq.s32.totalorder %s59, 0
      %s62 = sadd.s32 %s61, 1
      %s63 = scalar_select %p60, %s61, %s62
      %p66 = pneg %p60
      %p67 = scmp.eq.s32.totalorder %s13, 2
      %p68 = por %p66, %p67
      %p69 = scmp.ne.s32.totalorder %s61, %s64
      %p70 = scmp.eq.s32.totalorder %s13, 0
      %p71 = por %p69, %p70
      %p72 = scmp.ne.s32.totalorder %s61, %s64
      %p73 = scmp.eq.s32.totalorder %s18, 2
      %p74 = por %p72, %p73
      %p75 = scmp.ne.s32.totalorder %s64, %s65
      %p76 = scmp.eq.s32.totalorder %s18, 0
      %p77 = por %p75, %p76
      %p78 = scmp.ne.s32.totalorder %s64, %s65
      %p79 = scmp.eq.s32.totalorder %s19, 2
      %p80 = por %p78, %p79
      %p82 = scmp.ne.s32.totalorder %s65, %s81
      %p83 = scmp.eq.s32.totalorder %s19, 0
      %p84 = por %p82, %p83
      %s85 = ssub.s32 %s20, %s32
      %p86 = scmp.eq.s32.totalorder %s85, 0
      %s88 = sadd.s32 %s87, 1
      %s89 = scalar_select %p86, %s87, %s88
      %p92 = pneg %p86
      %p93 = scmp.eq.s32.totalorder %s13, 2
      %p94 = por %p92, %p93
      %p95 = scmp.ne.s32.totalorder %s87, %s90
      %p96 = scmp.eq.s32.totalorder %s13, 0
      %p97 = por %p95, %p96
      %p98 = scmp.ne.s32.totalorder %s87, %s90
      %p99 = scmp.eq.s32.totalorder %s18, 2
      %p100 = por %p98, %p99
      %p101 = scmp.ne.s32.totalorder %s90, %s91
      %p102 = scmp.eq.s32.totalorder %s18, 0
      %p103 = por %p101, %p102
      %p104 = scmp.ne.s32.totalorder %s90, %s91
      %p105 = scmp.eq.s32.totalorder %s19, 2
      %p106 = por %p104, %p105
      %p108 = scmp.ne.s32.totalorder %s91, %s107
      %p109 = scmp.eq.s32.totalorder %s19, 0
      %p110 = por %p108, %p109
      %p111 = scmp.le.s32.totalorder 1, %s13
      %p112 = scmp.lt.s32.totalorder %s13, 4
      %p113 = pnand %p111, %p112
      %p114 = pneg %p113
      // Predicated region
      $region9: #{tpu_custom_call.1} parent=5 // pred_check
        _
      $region10: #{tpu_custom_call.1} parent=5 // pred_check_branch
        %116 = sbr.rel (%p113) target = $region12
      $region11: #{tpu_custom_call.1} parent=5 // pred_region
        %s117 = ssub.s32 %s13, 1
      $region12: #{tpu_custom_call.1} parent=5 // pred_fallthru
        _
      %p118 = scmp.lt.s32.totalorder %s13, 3
      // Predicated region
      $region13: #{tpu_custom_call.1} parent=5 // pred_check
        %p119 = pneg %p118
      $region14: #{tpu_custom_call.1} parent=5 // pred_check_branch
        %121 = sbr.rel (%p119) target = $region16
      $region15: #{tpu_custom_call.1} parent=5 // pred_region
        // Predicated region
        $region17: #{tpu_custom_call.1} parent=15 // pred_check
          %p122 = pneg %p45
        $region18: #{tpu_custom_call.1} parent=15 // pred_check_branch
          %124 = sbr.rel (%p122) target = $region20
        $region19: #{tpu_custom_call.1} parent=15 // pred_region
          %s125 = sand.u32 %s35, 1
          %s126 = scalar_lea.sflag [#allocation5], %s125
          %s127 = sand.u32 %s35, 1
          %s128 = smul.addr %s127, 128
          %s129 = scalar_lea.vmem [#allocation4], %s128
          %s131 = ssub.s32 2048, 2048
          %132 = vsyncadd %s126, %s131
          %s133 = smul.addr %s21, 16
          %s134 = smul.addr %s133, 128
          %s135 = scalar_lea.hbm %s1, %s134
          %s136 = sshll.u32 %s129, 4
          %s137 = int_to_ptr.vmem [resolvable:$true] %s136
          %142 = dma.hbm_to_vmem [thread:$0]  %s135, 2048, %s137, %s126, 128, 128, 8
        $region20: #{tpu_custom_call.1} parent=15 // pred_fallthru
          _
        // Predicated region
        $region21: #{tpu_custom_call.1} parent=15 // pred_check
          %p143 = pneg %p71
        $region22: #{tpu_custom_call.1} parent=15 // pred_check_branch
          %145 = sbr.rel (%p143) target = $region24
        $region23: #{tpu_custom_call.1} parent=15 // pred_region
          %p146 = scmp.lt.s32.totalorder %s21, 2
          %s147 = scalar_select %p146, %s21, 2
          %s148 = scalar_lea.vmem %s2, %s147
        $region24: #{tpu_custom_call.1} parent=15 // pred_fallthru
          _
      $region16: #{tpu_custom_call.1} parent=5 // pred_fallthru
        _
      %p149 = scmp.le.s32.totalorder 1, %s13
      %p150 = scmp.lt.s32.totalorder %s13, 4
      %p151 = pnand %p149, %p150
      %p152 = pneg %p151
      // Predicated region
      $region25: #{tpu_custom_call.1} parent=5 // pred_check
        _
      $region26: #{tpu_custom_call.1} parent=5 // pred_check_branch
        %154 = sbr.rel (%p151) target = $region28
      $region27: #{tpu_custom_call.1} parent=5 // pred_region
        %s155 = ssub.s32 %s13, 1
        %s156 = sand.u32 %s38, 1
        %s157 = scalar_lea.sflag [#allocation5], %s156
        %s158 = sand.u32 %s38, 1
        %s159 = smul.addr %s158, 128
        %s160 = scalar_lea.vmem [#allocation4], %s159
        // Predicated region
        $region29: #{tpu_custom_call.1} parent=27 // pred_check
          %p161 = pneg %p51
        $region30: #{tpu_custom_call.1} parent=27 // pred_check_branch
          %163 = sbr.rel (%p161) target = $region32
        $region31: #{tpu_custom_call.1} parent=27 // pred_region
          %164 = dma.done %s157, 2048
        $region32: #{tpu_custom_call.1} parent=27 // pred_fallthru
          _
        %s165 = sand.u32 %s38, 1
        %s166 = scalar_lea.sflag [#allocation5], %s165
        %s167 = sand.u32 %s38, 1
        %s168 = smul.addr %s167, 128
        %s169 = scalar_lea.vmem [#allocation4], %s168
        %p170 = pneg %p51
        %p171 = pneg %p48
        %p172 = scmp.lt.s32.totalorder %s23, 2
        %s173 = scalar_select %p172, %s23, 2
        %s174 = scalar_lea.vmem %s2, %s173
        %p175 = pneg %p77
        %p176 = pneg %p74
        %p177 = pneg %p103
        %p178 = pneg %p100
        %p179 = scmp.lt.s32.totalorder %s23, 2
        %s180 = scalar_select %p179, %s23, 2
        %s181 = scalar_lea.vmem %s2, %s180
        %p182 = scmp.eq.s32.totalorder %s23, 0
        // Predicated region
        $region33: #{tpu_custom_call.1} parent=27 // pred_check
          %p183 = pneg %p182
        $region34: #{tpu_custom_call.1} parent=27 // pred_check_branch
          %185 = sbr.rel (%p183) target = $region36
        $region35: #{tpu_custom_call.1} parent=27 // pred_region
          %s186 = smul.u32 %s22, 8
          %s187 = smul.addr %s186, 16
          %s188 = scalar_lea.hbm %s0, %s187
          // Predicated region
          $region37: #{tpu_custom_call.1} parent=35 // pred_check
            _
          $region38: #{tpu_custom_call.1} parent=35 // pred_check_branch
            %190 = sbr.rel target = $region40
          $region39: #{tpu_custom_call.1} parent=35 // pred_region
            %191 = sst [smem:[#allocation10]] [#allocation9]
            %192 = sst [smem:[#allocation11]] [#allocation8]
          $region40: #{tpu_custom_call.1} parent=35 // pred_fallthru
            _
          %194 = shalt.err (0)
          %s196 = sshll.u32 [#allocation2], 4
          %s197 = int_to_ptr.vmem [resolvable:$true] %s196
          %199 = dma.hbm_to_vmem [thread:$0]  %s188, 128, %s197, [#allocation3]
          %s200 = smul.u32 8, 1
          %s201 = sshll.u32 %s200, 4
          %202 = dma.done [#allocation3], %s201
        $region36: #{tpu_custom_call.1} parent=27 // pred_fallthru
          _
        %v203 = vld [vmem:[#allocation2] sm:$0xff]
        %v204 = vld [vmem:[%s160] sm:$0xff]
        %v205 = vld [vmem:[%s160 + $0x8] sm:$0xff]
        %v206 = vld [vmem:[%s160 + $0x10] sm:$0xff]
        %v207 = vld [vmem:[%s160 + $0x18] sm:$0xff]
        %v208 = vld [vmem:[%s160 + $0x20] sm:$0xff]
        %v209 = vld [vmem:[%s160 + $0x28] sm:$0xff]
        %v210 = vld [vmem:[%s160 + $0x30] sm:$0xff]
        %v211 = vld [vmem:[%s160 + $0x38] sm:$0xff]
        %v212 = vld [vmem:[%s160 + $0x40] sm:$0xff]
        %v213 = vld [vmem:[%s160 + $0x48] sm:$0xff]
        %v214 = vld [vmem:[%s160 + $0x50] sm:$0xff]
        %v215 = vld [vmem:[%s160 + $0x58] sm:$0xff]
        %v216 = vld [vmem:[%s160 + $0x60] sm:$0xff]
        %v217 = vld [vmem:[%s160 + $0x68] sm:$0xff]
        %v218 = vld [vmem:[%s160 + $0x70] sm:$0xff]
        %v219 = vld [vmem:[%s160 + $0x78] sm:$0xff]
        %v220 = vld [vmem:[%s181] sm:$0x1]
        %v222 = vlaneseq
        %v223 = vshrl.u32 %v222, 7
        %v224 = vsub.s32 0, %v223
        %v225 = vrot.slane %v220, %v224
        %227 = vmatprep.subr.mxu0 0.0
        %228 = vmatpush1.msra.mxu0 %v204
        %229 = vmatprep.subr.mxu0 0.0
        %230 = vmatpush1.msra.mxu0 %v205
        %231 = vmatprep.subr.mxu0 0.0
        %232 = vmatpush1.msra.mxu0 %v206
        %233 = vmatprep.subr.mxu0 0.0
        %234 = vmatpush1.msra.mxu0 %v207
        %235 = vmatprep.subr.mxu0 0.0
        %236 = vmatpush1.msra.mxu0 %v208
        %237 = vmatprep.subr.mxu0 0.0
        %238 = vmatpush1.msra.mxu0 %v209
        %239 = vmatprep.subr.mxu0 0.0
        %240 = vmatpush1.msra.mxu0 %v210
        %241 = vmatprep.subr.mxu0 0.0
        %242 = vmatpush1.msra.mxu0 %v211
        %243 = vmatprep.subr.mxu0 0.0
        %244 = vmatpush1.msra.mxu0 %v212
        %245 = vmatprep.subr.mxu0 0.0
        %246 = vmatpush1.msra.mxu0 %v213
        %247 = vmatprep.subr.mxu0 0.0
        %248 = vmatpush1.msra.mxu0 %v214
        %249 = vmatprep.subr.mxu0 0.0
        %250 = vmatpush1.msra.mxu0 %v215
        %251 = vmatprep.subr.mxu0 0.0
        %252 = vmatpush1.msra.mxu0 %v216
        %253 = vmatprep.subr.mxu0 0.0
        %254 = vmatpush1.msra.mxu0 %v217
        %255 = vmatprep.subr.mxu0 0.0
        %256 = vmatpush1.msra.mxu0 %v218
        %257 = vmatprep.subr.mxu0 0.0
        %258 = vmatpush1.msra.mxu0 %v219
        %259 = vmatprep.subr.mxu0 0.0
        %260 = vmatpush1.msra.mxu0 0.0
        %261 = vmatprep.subr.mxu0 0.0
        %262 = vmatpush1.msra.mxu0 0.0
        %263 = vmatprep.subr.mxu0 0.0
        %264 = vmatpush1.msra.mxu0 0.0
        %265 = vmatprep.subr.mxu0 0.0
        %266 = vmatpush1.msra.mxu0 0.0
        %267 = vmatprep.subr.mxu0 0.0
        %268 = vmatpush1.msra.mxu0 0.0
        %269 = vmatprep.subr.mxu0 0.0
        %270 = vmatpush1.msra.mxu0 0.0
        %271 = vmatprep.subr.mxu0 0.0
        %272 = vmatpush1.msra.mxu0 0.0
        %273 = vmatprep.subr.mxu0 0.0
        %274 = vmatpush1.msra.mxu0 0.0
        %275 = vmatprep.subr.mxu0 0.0
        %276 = vmatpush1.msra.mxu0 0.0
        %277 = vmatprep.subr.mxu0 0.0
        %278 = vmatpush1.msra.mxu0 0.0
        %279 = vmatprep.subr.mxu0 0.0
        %280 = vmatpush1.msra.mxu0 0.0
        %281 = vmatprep.subr.mxu0 0.0
        %282 = vmatpush1.msra.mxu0 0.0
        %283 = vmatprep.subr.mxu0 0.0
        %284 = vmatpush1.msra.mxu0 0.0
        %285 = vmatprep.subr.mxu0 0.0
        %286 = vmatpush1.msra.mxu0 0.0
        %287 = vmatprep.subr.mxu0 0.0
        %288 = vmatpush1.msra.mxu0 0.0
        %289 = vmatprep.subr.mxu0 0.0
        %290 = vmatpush1.msra.mxu0 0.0
        %291 = vmatprep.mubr.f32.mxu0 0.0
        %292 = vmatmul.mubr.f32.gmra.mrb[0].mxu0 %v203
        %v293 = vpop.f32.mrb[0].mxu0
        %v294 = vadd.f32 %v225, %v293
        %v295 = vpop.f32.mrb[0].mxu0
        %296 = vdwg.mxu0
        %p297 = scmp.lt.s32.totalorder %s23, 2
        // Predicated region
        $region41: #{tpu_custom_call.1} parent=27 // pred_check
          %p298 = pneg %p297
        $region42: #{tpu_custom_call.1} parent=27 // pred_check_branch
          %300 = sbr.rel (%p298) target = $region44
        $region43: #{tpu_custom_call.1} parent=27 // pred_region
          %v301 = vmax.f32 %v294, 0.0
          %302 = vst [vmem:[#allocation2] sm:$0xff] %v301
        $region44: #{tpu_custom_call.1} parent=27 // pred_fallthru
          _
        %p303 = scmp.eq.s32.totalorder %s23, 2
        // Predicated region
        $region45: #{tpu_custom_call.1} parent=27 // pred_check
          %p304 = pneg %p303
        $region46: #{tpu_custom_call.1} parent=27 // pred_check_branch
          %306 = sbr.rel (%p304) target = $region48
        $region47: #{tpu_custom_call.1} parent=27 // pred_region
          %307 = vst [vmem:[#allocation7] sm:$0xff] %v294
        $region48: #{tpu_custom_call.1} parent=27 // pred_fallthru
          _
        // Predicated region
        $region49: #{tpu_custom_call.1} parent=27 // pred_check
          %p308 = pneg %p100
        $region50: #{tpu_custom_call.1} parent=27 // pred_check_branch
          %310 = sbr.rel (%p308) target = $region52
        $region51: #{tpu_custom_call.1} parent=27 // pred_region
          %s312 = ssub.s32 128, 128
          %313 = vsyncadd [#allocation6], %s312
          %s314 = smul.addr %s22, 128
          %s315 = scalar_lea.hbm %s3, %s314
          %s317 = sshll.u32 [#allocation7], 4
          %s318 = int_to_ptr.vmem [resolvable:$true] %s317
          %320 = dma.vmem_to_hbm [thread:$0]  %s318, 128, %s315, [#allocation6]
        $region52: #{tpu_custom_call.1} parent=27 // pred_fallthru
          _
        // Predicated region
        $region53: #{tpu_custom_call.1} parent=27 // pred_check
          %p321 = pneg %p100
        $region54: #{tpu_custom_call.1} parent=27 // pred_check_branch
          %323 = sbr.rel (%p321) target = $region56
        $region55: #{tpu_custom_call.1} parent=27 // pred_region
          %324 = dma.done [#allocation6], 128
        $region56: #{tpu_custom_call.1} parent=27 // pred_fallthru
          _
      $region28: #{tpu_custom_call.1} parent=5 // pred_fallthru
        _
      %p325 = scmp.le.s32.totalorder 2, %s13
      // Predicated region
      $region57: #{tpu_custom_call.1} parent=5 // pred_check
        %p326 = pneg %p325
      $region58: #{tpu_custom_call.1} parent=5 // pred_check_branch
        %328 = sbr.rel (%p326) target = $region60
      $region59: #{tpu_custom_call.1} parent=5 // pred_region
        %s329 = ssub.s32 %s13, 2
      $region60: #{tpu_custom_call.1} parent=5 // pred_fallthru
        _
    $region6: #{tpu_custom_call.1} parent=1 // loop_footer
      %s17 = sadd.s32 1, %s13
    $region7: #{tpu_custom_call.1} parent=1 // loop_footer_branch
      %12 = sbr.rel target = $region3
    $region8: #{tpu_custom_call.1} parent=1 // loop_exit
      _
    %330 = vsyncpa [#allocation5], 1
    %s331 = scalar_lea.sflag [#allocation5], 1
    %332 = vsyncpa %s331, 1
    %333 = vsyncpa [#allocation6], 1
    %s334 = scalar_lea.sflag [#allocation6], 1
    %335 = vsyncpa %s334, 1
  %336 = vsyncmov [#allocation3]
  %s337 = vpop.sfrf %336
  %p338 = scmp.eq.s32.totalorder %s337, 0
  %p339 = pneg %p338
  %341 = shalt.err (%p339)

</llo_original>
